<compile_context>
chip_gen: v7x
topology: tpu7x:2x2x1
jax: 0.10.0
libtpu: 0.0.40
codegen_flags: <defaults>
</compile_context>

<pallas_src>
import functools
import math

import jax
import jax.numpy as jnp
from jax.experimental import pallas as pl
from jax.experimental.pallas import tpu as pltpu


def _round_up(x: int, m: int) -> int:
    return (x + m - 1) // m * m


def _next_pow2(n: int) -> int:
    n = max(int(n), 1)
    return 1 << (n - 1).bit_length()


def _prev_pow2(n: int) -> int:
    n = max(int(n), 1)
    return 1 << (n.bit_length() - 1)


def _default_num_splits() -> int:
    """v7x has 2 TensorCores per chip; v5e/v6e have 1 (split is pure overhead)."""
    try:
        kind = jax.devices()[0].device_kind.lower()
    except Exception:
        return 1
    return 2 if ("v7" in kind or "7x" in kind) else 1


def _kl_s_colsum_kernel(x_ref, w1_ref, b1_ref, acc_ref, *, tanh_dtype):
    i = pl.program_id(1)  # inner ("arbitrary") batch-tile axis

    @pl.when(i == 0)
    def _init():
        acc_ref[...] = jnp.zeros_like(acc_ref)

    # Single MXU matmul: bf16 operands, f32 accumulation.
    h = jnp.dot(x_ref[...], w1_ref[...], preferred_element_type=jnp.float32)
    # Bias + tanh. f32 by default (v5e-safe); bf16 optional on v6e/v7x.
    h = jnp.tanh((h + b1_ref[...]).astype(tanh_dtype)).astype(jnp.float32)

    # Fold (TB, H) -> (8, H) with sublane-tile-aligned static slices + VPU adds
    # only: no padded-row mask (corrected exactly in the epilogue) and no XLU
    # sublane reduce (deferred to the epilogue).
    while h.shape[0] > 8:
        half = h.shape[0] // 2
        h = h[:half, :] + h[half:, :]
    acc_ref[...] += h


def kl_with_s(x, log_abs_det, params, n_nod: int, *, tb: int = 2048,
              num_splits=None, tanh_dtype=jnp.float32):
    """x: (B, n_nod) f32, log_abs_det: (B,) f32 -> scalar f32 loss."""
    w1, b1, w2, b2 = params
    B, D = x.shape
    H = w1.shape[1]

    if num_splits is None:
        num_splits = _default_num_splits()
    num_splits = max(1, int(num_splits))

    # Batch tile: power of two (enables the VPU fold), >=16 (bf16 sublane
    # packing), no larger than the per-split batch, and capped so the (tb, H)
    # f32 tanh intermediate stays <= ~4 MiB on every chip generation.
    tb = _next_pow2(max(int(tb), 16))
    tb = min(tb, _next_pow2(max(16, -(-B // num_splits))))
    tb = min(tb, max(16, _prev_pow2((4 << 20) // (H * 4))))

    b_pad = _round_up(B, num_splits * tb)
    steps = b_pad // (num_splits * tb)
    if b_pad != B:
        # Zero fill is required for the exact padded-row correction below.
        x = jnp.pad(x, ((0, b_pad - B), (0, 0)))

    x_bf = x.astype(jnp.bfloat16)
    w1_bf = w1.astype(jnp.bfloat16)
    b1_row = b1.reshape(1, H).astype(jnp.float32)

    kernel = functools.partial(_kl_s_colsum_kernel, tanh_dtype=tanh_dtype)

    cost = pl.CostEstimate(
        flops=2 * b_pad * D * H + 3 * b_pad * H,
        transcendentals=b_pad * H,
        bytes_accessed=(b_pad * D * 2 + D * H * 2 + H * 4
                        + num_splits * 8 * H * 4),
    )

    vmem_limit = int(min(100 << 20,
                         max(16 << 20,
                             6 * tb * H * 4 + 4 * tb * D * 2 + 2 * D * H * 2)))

    acc = pl.pallas_call(
        kernel,
        out_shape=jax.ShapeDtypeStruct((num_splits * 8, H), jnp.float32),
        grid_spec=pltpu.PrefetchScalarGridSpec(
            num_scalar_prefetch=0,
            grid=(num_splits, steps),
            in_specs=[
                pl.BlockSpec((tb, D), lambda c, i, s=steps: (c * s + i, 0)),  # x
                pl.BlockSpec((D, H), lambda c, i: (0, 0)),                    # W1
                pl.BlockSpec((1, H), lambda c, i: (0, 0)),                    # b1
            ],
            out_specs=pl.BlockSpec((8, H), lambda c, i: (c, 0)),  # per-split acc
        ),
        compiler_params=pltpu.CompilerParams(
            dimension_semantics=("parallel", "arbitrary"),
            vmem_limit_bytes=vmem_limit,
        ),
        cost_estimate=cost,
    )(x_bf, w1_bf, b1_row)

    # Epilogue (tiny, fused by XLA):
    #   sublane reduce of the per-split partials, exact removal of the
    #   zero-padded rows (each contributed tanh(b1)), lane-dense W2 dot,
    #   then the separable scalar terms.
    col = jnp.sum(acc, axis=0)                                       # (H,)
    n_pad = b_pad - B
    if n_pad:
        pad_row = jnp.tanh(b1_row[0].astype(tanh_dtype)).astype(jnp.float32)
        col = col - jnp.float32(n_pad) * pad_row
    s_sum = jnp.dot(col, w2.reshape(-1).astype(jnp.float32))
    const = n_nod / 2.0 * (1.0 + math.log(2.0 * math.pi))
    return s_sum / B + b2.reshape(()) - jnp.mean(log_abs_det) - const


def init_s_params(key, n_nod: int, hidden: int):
    """Deterministic init of the synthetic action network S."""
    k1, k2, k3, k4 = jax.random.split(key, 4)
    w1 = jax.random.normal(k1, (n_nod, hidden), jnp.float32) / jnp.sqrt(n_nod)
    b1 = jax.random.normal(k2, (1, hidden), jnp.float32) * 0.01
    w2 = jax.random.normal(k3, (hidden, 1), jnp.float32) / jnp.sqrt(hidden)
    b2 = jax.random.normal(k4, (1, 1), jnp.float32) * 0.01
    return w1, b1, w2, b2


def kl_with_s_ref(x, log_abs_det, params, n_nod: int, *,
                  match_kernel_precision: bool = False):
    """Pure-JAX reference of the PyTorch forward."""
    w1, b1, w2, b2 = params
    if match_kernel_precision:
        pre = jnp.dot(x.astype(jnp.bfloat16), w1.astype(jnp.bfloat16),
                      preferred_element_type=jnp.float32)
    else:
        pre = x @ w1
    s = jnp.tanh(pre + b1) @ w2 + b2                       # (B, 1)
    loss = jnp.mean(s[:, 0] - log_abs_det)
    loss -= n_nod / 2 * (1.0 + jnp.log(jnp.float32(2.0 * math.pi)))
    return loss


if __name__ == "__main__":
    key = jax.random.PRNGKey(0)

    # Config 1: batch fits one tile -> single grid step, default tb/split.
    B, N_NOD, HIDDEN = 256, 32, 128
    kx, klad, kp = jax.random.split(key, 3)
    x = jax.random.normal(kx, (B, N_NOD), jnp.float32)
    lad = jax.random.normal(klad, (B,), jnp.float32)
    params = init_s_params(kp, N_NOD, HIDDEN)

    loss = jax.block_until_ready(kl_with_s(x, lad, params, N_NOD))
    ref_bf16 = kl_with_s_ref(x, lad, params, N_NOD, match_kernel_precision=True)
    ref_f32 = kl_with_s_ref(x, lad, params, N_NOD, match_kernel_precision=False)
    assert jnp.allclose(loss, ref_bf16, atol=1e-4, rtol=1e-4), (loss, ref_bf16)
    assert jnp.allclose(loss, ref_f32, atol=5e-2, rtol=5e-2), (loss, ref_f32)

    # Config 2: ragged batch -> exercises the exact padded-row correction.
    B2 = 100
    x2 = jax.random.normal(jax.random.PRNGKey(1), (B2, N_NOD), jnp.float32)
    lad2 = jax.random.normal(jax.random.PRNGKey(2), (B2,), jnp.float32)
    loss2 = jax.block_until_ready(kl_with_s(x2, lad2, params, N_NOD, tb=64))
    ref2 = kl_with_s_ref(x2, lad2, params, N_NOD, match_kernel_precision=True)
    assert jnp.allclose(loss2, ref2, atol=1e-4, rtol=1e-4), (loss2, ref2)

    # Config 3: forced 2-way split (the v7x two-TensorCore path; correct but
    # serial on 1-TC chips), multi-step inner grid + ragged tail.
    B3 = 1000
    x3 = jax.random.normal(jax.random.PRNGKey(3), (B3, N_NOD), jnp.float32)
    lad3 = jax.random.normal(jax.random.PRNGKey(4), (B3,), jnp.float32)
    loss3 = jax.block_until_ready(
        kl_with_s(x3, lad3, params, N_NOD, tb=128, num_splits=2))
    ref3 = kl_with_s_ref(x3, lad3, params, N_NOD, match_kernel_precision=True)
    assert jnp.allclose(loss3, ref3, atol=1e-4, rtol=1e-4), (loss3, ref3)

    print("KERNEL_OK")
</pallas_src>

<mosaic_0001>
module attributes {stable_mosaic.version = 11 : i64} {
  func.func @_kl_s_colsum_kernel(%arg0: i32, %arg1: i32, %arg2: memref<256x32xbf16, #tpu.memory_space<vmem>>, %arg3: memref<32x128xbf16, #tpu.memory_space<vmem>>, %arg4: memref<1x128xf32, #tpu.memory_space<vmem>>, %arg5: memref<8x128xf32, #tpu.memory_space<vmem>>) attributes {dimension_semantics = [#tpu.dimension_semantics<parallel>, #tpu.dimension_semantics<arbitrary>], iteration_bounds = array<i64: 1, 1>, scalar_prefetch = 0 : i64, scratch_operands = 0 : i64, tpu.core_type = #tpu.core_type<tc>, window_params = [{transform_indices = @transform_0, window_bounds = array<i64: 256, 32>}, {pipeline_mode = #tpu.pipeline_mode<synchronous>, transform_indices = @transform_1, window_bounds = array<i64: 32, 128>}, {pipeline_mode = #tpu.pipeline_mode<synchronous>, transform_indices = @transform_2, window_bounds = array<i64: 1, 128>}, {transform_indices = @transform_3, window_bounds = array<i64: 8, 128>}]} {
    %c0_i32 = arith.constant 0 : i32
    %0 = arith.cmpi eq, %arg1, %c0_i32 : i32
    %1 = arith.extui %0 : i1 to i32
    %c0_i32_0 = arith.constant 0 : i32
    %2 = arith.cmpi ne, %1, %c0_i32_0 : i32
    scf.if %2 {
      %cst_10 = arith.constant 0.000000e+00 : f32
      %28 = vector.broadcast %cst_10 : f32 to vector<8x128xf32>
      %c0_11 = arith.constant 0 : index
      %c0_12 = arith.constant 0 : index
      %29 = vector.load %arg5[%c0_11, %c0_12] : memref<8x128xf32, #tpu.memory_space<vmem>>, vector<8x128xf32>
      tpu.vector_store %arg5[%c0_11, %c0_12], %28 {strides = array<i32>} : memref<8x128xf32, #tpu.memory_space<vmem>>, vector<8x128xf32>,
    } else {
    }
    %c0 = arith.constant 0 : index
    %c0_1 = arith.constant 0 : index
    %3 = vector.load %arg2[%c0, %c0_1] : memref<256x32xbf16, #tpu.memory_space<vmem>>, vector<256x32xbf16>
    %c0_2 = arith.constant 0 : index
    %c0_3 = arith.constant 0 : index
    %4 = vector.load %arg3[%c0_2, %c0_3] : memref<32x128xbf16, #tpu.memory_space<vmem>>, vector<32x128xbf16>
    %cst = arith.constant dense<0.000000e+00> : vector<256x128xf32>
    %5 = tpu.matmul %3, %4, %cst {dimension_numbers = #tpu.dot_dimension_numbers<[1], [0], [0], [1], [0, 0, 1, 1], [], []>} : vector<256x32xbf16>, vector<32x128xbf16>, vector<256x128xf32> -> vector<256x128xf32>
    %c0_4 = arith.constant 0 : index
    %c0_5 = arith.constant 0 : index
    %6 = vector.load %arg4[%c0_4, %c0_5] : memref<1x128xf32, #tpu.memory_space<vmem>>, vector<1x128xf32>
    %7 = vector.broadcast %6 : vector<1x128xf32> to vector<256x128xf32>
    %8 = arith.addf %5, %7 : vector<256x128xf32>
    %9 = math.tanh %8 : vector<256x128xf32>
    %10 = vector.extract_strided_slice %9 {offsets = [0, 0], sizes = [128, 128], strides = [1, 1]} : vector<256x128xf32> to vector<128x128xf32>
    %11 = vector.extract_strided_slice %9 {offsets = [128, 0], sizes = [128, 128], strides = [1, 1]} : vector<256x128xf32> to vector<128x128xf32>
    %12 = arith.addf %10, %11 : vector<128x128xf32>
    %13 = vector.extract_strided_slice %12 {offsets = [0, 0], sizes = [64, 128], strides = [1, 1]} : vector<128x128xf32> to vector<64x128xf32>
    %14 = vector.extract_strided_slice %12 {offsets = [64, 0], sizes = [64, 128], strides = [1, 1]} : vector<128x128xf32> to vector<64x128xf32>
    %15 = arith.addf %13, %14 : vector<64x128xf32>
    %16 = vector.extract_strided_slice %15 {offsets = [0, 0], sizes = [32, 128], strides = [1, 1]} : vector<64x128xf32> to vector<32x128xf32>
    %17 = vector.extract_strided_slice %15 {offsets = [32, 0], sizes = [32, 128], strides = [1, 1]} : vector<64x128xf32> to vector<32x128xf32>
    %18 = arith.addf %16, %17 : vector<32x128xf32>
    %19 = vector.extract_strided_slice %18 {offsets = [0, 0], sizes = [16, 128], strides = [1, 1]} : vector<32x128xf32> to vector<16x128xf32>
    %20 = vector.extract_strided_slice %18 {offsets = [16, 0], sizes = [16, 128], strides = [1, 1]} : vector<32x128xf32> to vector<16x128xf32>
    %21 = arith.addf %19, %20 : vector<16x128xf32>
    %22 = vector.extract_strided_slice %21 {offsets = [0, 0], sizes = [8, 128], strides = [1, 1]} : vector<16x128xf32> to vector<8x128xf32>
    %23 = vector.extract_strided_slice %21 {offsets = [8, 0], sizes = [8, 128], strides = [1, 1]} : vector<16x128xf32> to vector<8x128xf32>
    %24 = arith.addf %22, %23 : vector<8x128xf32>
    %c0_6 = arith.constant 0 : index
    %c0_7 = arith.constant 0 : index
    %25 = vector.load %arg5[%c0_6, %c0_7] : memref<8x128xf32, #tpu.memory_space<vmem>>, vector<8x128xf32>
    %26 = arith.addf %25, %24 : vector<8x128xf32>
    %c0_8 = arith.constant 0 : index
    %c0_9 = arith.constant 0 : index
    %27 = vector.load %arg5[%c0_8, %c0_9] : memref<8x128xf32, #tpu.memory_space<vmem>>, vector<8x128xf32>
    tpu.vector_store %arg5[%c0_8, %c0_9], %26 {strides = array<i32>} : memref<8x128xf32, #tpu.memory_space<vmem>>, vector<8x128xf32>,
    return
  }
  func.func @transform_0(%arg0: i32, %arg1: i32) -> (i32, i32) {
    %c1_i32 = arith.constant 1 : i32
    %0 = arith.muli %arg0, %c1_i32 : i32
    %1 = arith.addi %0, %arg1 : i32
    %c0_i32 = arith.constant 0 : i32
    %c0_i32_0 = arith.constant 0 : i32
    return %1, %c0_i32 : i32, i32
  }
  func.func @transform_1(%arg0: i32, %arg1: i32) -> (i32, i32) {
    %c0_i32 = arith.constant 0 : i32
    %c0_i32_0 = arith.constant 0 : i32
    %c0_i32_1 = arith.constant 0 : i32
    return %c0_i32, %c0_i32_0 : i32, i32
  }
  func.func @transform_2(%arg0: i32, %arg1: i32) -> (i32, i32) {
    %c0_i32 = arith.constant 0 : i32
    %c0_i32_0 = arith.constant 0 : i32
    %c0_i32_1 = arith.constant 0 : i32
    return %c0_i32, %c0_i32_0 : i32, i32
  }
  func.func @transform_3(%arg0: i32, %arg1: i32) -> (i32, i32) {
    %c0_i32 = arith.constant 0 : i32
    %c0_i32_0 = arith.constant 0 : i32
    return %arg0, %c0_i32 : i32, i32
  }
}

</mosaic_0001>

<llo_original>
// kernel: tpu_custom_call.1
$region0: #{tpu_custom_call.1}
  #allocation0 [shape = 'u32[]', space=smem, size = 0x4, offset = 0x4, fixed_abs, tag = 'smem constant byte address 0x4 - core index']
  #allocation1 [shape = 'u32[144,128]{1,0:T(1,128)}', space=vmem, size = 0x12000, scoped, tag = 'internal scratch']
  %s0 = inlined_call_operand.vmem [shape: bf16[256,32], index: 0, kind: input, shape index: {}]
  %s1 = inlined_call_operand.vmem [shape: bf16[32,128], index: 1, kind: input, shape index: {}]
  %s2 = inlined_call_operand.vmem [shape: f32[1,128], index: 2, kind: input, shape index: {}]
  %s3 = inlined_call_operand.hbm [shape: f32[8,128], index: 3, kind: output, shape index: {}]
  %s4 = sld [smem:[#allocation0]]
  $region26: #{tpu_custom_call.1} parent=0
    _
  %s6 = ssub.s32 1, %s4
  %s7 = scalar_select 0, %s6, %s4
  $region1: #{tpu_custom_call.1} parent=0
    #allocation2 [shape = 'u8[4096]{0}', space=vmem, size = 0x1000, scoped, tag = 'output window, operand 0, single buffered']
    #allocation3 [shape = 's32[1]{0}', space=sflag, size = 0x4, scoped, tag = 'scoped memory for tpu_custom_call.1']
    %8 = vsyncpa [#allocation3], 0
    // Predicated region
    $region2: #{tpu_custom_call.1} parent=1 // pred_check
      _
    $region3: #{tpu_custom_call.1} parent=1 // pred_check_branch
      %10 = sbr.rel (0) target = $region5
    $region4: #{tpu_custom_call.1} parent=1 // pred_region
      %s11 = sadd.s32 0, 0
      %s12 = smul.u32 32, %s11
      %p13 = scmp.lt.s32.totalorder %s12, 31
      %s14 = scalar_select %p13, %s12, 31
      %s15 = smul.addr %s14, 4
      %s16 = scalar_lea.vmem %s0, %s15
      %s17 = sadd.s32 0, 0
      %s18 = smul.u32 32, %s17
    $region5: #{tpu_custom_call.1} parent=1 // pred_fallthru
      _
    // Predicated region
    $region6: #{tpu_custom_call.1} parent=1 // pred_check
      _
    $region7: #{tpu_custom_call.1} parent=1 // pred_check_branch
      %20 = sbr.rel (0) target = $region9
    $region8: #{tpu_custom_call.1} parent=1 // pred_region
      _
    $region9: #{tpu_custom_call.1} parent=1 // pred_fallthru
      _
    // Predicated region
    $region10: #{tpu_custom_call.1} parent=1 // pred_check
      _
    $region11: #{tpu_custom_call.1} parent=1 // pred_check_branch
      %22 = sbr.rel (0) target = $region13
    $region12: #{tpu_custom_call.1} parent=1 // pred_region
      _
    $region13: #{tpu_custom_call.1} parent=1 // pred_fallthru
      _
    %s23 = sadd.s32 0, 0
    %s24 = smul.u32 32, %s23
    %p25 = scmp.lt.s32.totalorder %s24, 31
    %s26 = scalar_select %p25, %s24, 31
    %s27 = smul.addr %s26, 4
    %s28 = scalar_lea.vmem %s0, %s27
    %s29 = sadd.s32 0, 0
    %s30 = smul.u32 32, %s29
    %p31 = scmp.lt.s32.totalorder %s30, 31
    %s32 = scalar_select %p31, %s30, 31
    %s33 = smul.addr %s32, 4
    %s34 = scalar_lea.vmem %s0, %s33
    %s35 = sadd.s32 0, 0
    %s36 = smul.u32 32, %s35
    %p38 = scmp.eq.s32.totalorder 0, 0
    // Predicated region
    $region14: #{tpu_custom_call.1} parent=1 // pred_check
      %p39 = pneg %p38
    $region15: #{tpu_custom_call.1} parent=1 // pred_check_branch
      %41 = sbr.rel (%p39) target = $region17
    $region16: #{tpu_custom_call.1} parent=1 // pred_region
      %42 = vst [vmem:[#allocation2] sm:$0xff] 0.0
    $region17: #{tpu_custom_call.1} parent=1 // pred_fallthru
      _
    %v43 = vld [vmem:[%s34] sm:$0xf]
    %v44 = vld [vmem:[%s34 + $0x4] sm:$0xf]
    %v45 = vld [vmem:[%s34 + $0x8] sm:$0xf]
    %v46 = vld [vmem:[%s34 + $0xc] sm:$0xf]
    %v47 = vld [vmem:[%s34 + $0x10] sm:$0xf]
    %v48 = vld [vmem:[%s34 + $0x14] sm:$0xf]
    %v49 = vld [vmem:[%s34 + $0x18] sm:$0xf]
    %v50 = vld [vmem:[%s34 + $0x1c] sm:$0xf]
    %v51 = vld [vmem:[%s34 + $0x20] sm:$0xf]
    %v52 = vld [vmem:[%s34 + $0x24] sm:$0xf]
    %v53 = vld [vmem:[%s34 + $0x28] sm:$0xf]
    %v54 = vld [vmem:[%s34 + $0x2c] sm:$0xf]
    %v55 = vld [vmem:[%s34 + $0x30] sm:$0xf]
    %v56 = vld [vmem:[%s34 + $0x34] sm:$0xf]
    %v57 = vld [vmem:[%s34 + $0x38] sm:$0xf]
    %v58 = vld [vmem:[%s34 + $0x3c] sm:$0xf]
    %v59 = vld [vmem:[%s34 + $0x40] sm:$0xf]
    %v60 = vld [vmem:[%s34 + $0x44] sm:$0xf]
    %v61 = vld [vmem:[%s34 + $0x48] sm:$0xf]
    %v62 = vld [vmem:[%s34 + $0x4c] sm:$0xf]
    %v63 = vld [vmem:[%s34 + $0x50] sm:$0xf]
    %v64 = vld [vmem:[%s34 + $0x54] sm:$0xf]
    %v65 = vld [vmem:[%s34 + $0x58] sm:$0xf]
    %v66 = vld [vmem:[%s34 + $0x5c] sm:$0xf]
    %v67 = vld [vmem:[%s34 + $0x60] sm:$0xf]
    %v68 = vld [vmem:[%s34 + $0x64] sm:$0xf]
    %v69 = vld [vmem:[%s34 + $0x68] sm:$0xf]
    %v70 = vld [vmem:[%s34 + $0x6c] sm:$0xf]
    %v71 = vld [vmem:[%s34 + $0x70] sm:$0xf]
    %v72 = vld [vmem:[%s34 + $0x74] sm:$0xf]
    %v73 = vld [vmem:[%s34 + $0x78] sm:$0xf]
    %v74 = vld [vmem:[%s34 + $0x7c] sm:$0xf]
    %v75 = vld [vmem:[%s1] sm:$0xf]
    %v76 = vld [vmem:[%s1 + $0x4] sm:$0xf]
    %v77 = vld [vmem:[%s1 + $0x8] sm:$0xf]
    %v78 = vld [vmem:[%s1 + $0xc] sm:$0xf]
    %v79 = vld [vmem:[%s2] sm:$0x1]
    %v81 = vlaneseq
    %v82 = vshrl.u32 %v81, 7
    %v83 = vsub.s32 0, %v82
    %v84 = vrot.slane %v79, %v83
    %v118 = vunpack.c.l.b16 %v43
    %v119 = vunpack.c.l.b16 %v44
    %v120 = vunpack.c.l.b16 %v45
    %v121 = vunpack.c.l.b16 %v46
    %v122 = vunpack.c.l.b16 %v47
    %v123 = vunpack.c.l.b16 %v48
    %v124 = vunpack.c.l.b16 %v49
    %v125 = vunpack.c.l.b16 %v50
    %v126 = vunpack.c.l.b16 %v51
    %v127 = vunpack.c.l.b16 %v52
    %v128 = vunpack.c.l.b16 %v53
    %v129 = vunpack.c.l.b16 %v54
    %v130 = vunpack.c.l.b16 %v55
    %v131 = vunpack.c.l.b16 %v56
    %v132 = vunpack.c.l.b16 %v57
    %v133 = vunpack.c.l.b16 %v58
    %v134 = vunpack.c.l.b16 %v59
    %v135 = vunpack.c.l.b16 %v60
    %v136 = vunpack.c.l.b16 %v61
    %v137 = vunpack.c.l.b16 %v62
    %v138 = vunpack.c.l.b16 %v63
    %v139 = vunpack.c.l.b16 %v64
    %v140 = vunpack.c.l.b16 %v65
    %v141 = vunpack.c.l.b16 %v66
    %v142 = vunpack.c.l.b16 %v67
    %v143 = vunpack.c.l.b16 %v68
    %v144 = vunpack.c.l.b16 %v69
    %v145 = vunpack.c.l.b16 %v70
    %v146 = vunpack.c.l.b16 %v71
    %v147 = vunpack.c.l.b16 %v72
    %v148 = vunpack.c.l.b16 %v73
    %v149 = vunpack.c.l.b16 %v74
    %v150 = vpack.c.b16 %v119, %v118
    %v151 = vpack.c.b16 %v121, %v120
    %v152 = vpack.c.b16 %v123, %v122
    %v153 = vpack.c.b16 %v125, %v124
    %v154 = vpack.c.b16 %v127, %v126
    %v155 = vpack.c.b16 %v129, %v128
    %v156 = vpack.c.b16 %v131, %v130
    %v157 = vpack.c.b16 %v133, %v132
    %v158 = vpack.c.b16 %v135, %v134
    %v159 = vpack.c.b16 %v137, %v136
    %v160 = vpack.c.b16 %v139, %v138
    %v161 = vpack.c.b16 %v141, %v140
    %v162 = vpack.c.b16 %v143, %v142
    %v163 = vpack.c.b16 %v145, %v144
    %v164 = vpack.c.b16 %v147, %v146
    %v165 = vpack.c.b16 %v149, %v148
    %v170 = vunpack.c.l.b16 %v75
    %v171 = vunpack.c.l.b16 %v76
    %v172 = vunpack.c.l.b16 %v77
    %v173 = vunpack.c.l.b16 %v78
    %v174 = vpack.c.b16 %v171, %v170
    %v175 = vpack.c.b16 %v173, %v172
    %vm178 = vcmask 261120
    %v180 = vsel %vm178, %v150, 0
    %v183 = vsel %vm178, %v151, 0
    %v186 = vsel %vm178, %v152, 0
    %v189 = vsel %vm178, %v153, 0
    %v192 = vsel %vm178, %v154, 0
    %v195 = vsel %vm178, %v155, 0
    %v198 = vsel %vm178, %v156, 0
    %v201 = vsel %vm178, %v157, 0
    %v204 = vsel %vm178, %v158, 0
    %v207 = vsel %vm178, %v159, 0
    %v210 = vsel %vm178, %v160, 0
    %v213 = vsel %vm178, %v161, 0
    %v216 = vsel %vm178, %v162, 0
    %v219 = vsel %vm178, %v163, 0
    %v222 = vsel %vm178, %v164, 0
    %v225 = vsel %vm178, %v165, 0
    %227 = vmatprep.subr.bf16.mxu0 0
    %228 = vmatpush1.bf16.msra.mxu0 %v174
    %229 = vmatprep.subr.bf16.mxu0 0
    %230 = vmatpush1.bf16.msra.mxu0 %v175
    %231 = vmatprep.subr.bf16.mxu0 0
    %232 = vmatpush1.bf16.msra.mxu0 0
    %233 = vmatprep.subr.bf16.mxu0 0
    %234 = vmatpush1.bf16.msra.mxu0 0
    %235 = vmatprep.subr.bf16.mxu0 0
    %236 = vmatpush1.bf16.msra.mxu0 0
    %237 = vmatprep.subr.bf16.mxu0 0
    %238 = vmatpush1.bf16.msra.mxu0 0
    %239 = vmatprep.subr.bf16.mxu0 0
    %240 = vmatpush1.bf16.msra.mxu0 0
    %241 = vmatprep.subr.bf16.mxu0 0
    %242 = vmatpush1.bf16.msra.mxu0 0
    %243 = vmatprep.subr.bf16.mxu0 0
    %244 = vmatpush1.bf16.msra.mxu0 0
    %245 = vmatprep.subr.bf16.mxu0 0
    %246 = vmatpush1.bf16.msra.mxu0 0
    %247 = vmatprep.subr.bf16.mxu0 0
    %248 = vmatpush1.bf16.msra.mxu0 0
    %249 = vmatprep.subr.bf16.mxu0 0
    %250 = vmatpush1.bf16.msra.mxu0 0
    %251 = vmatprep.subr.bf16.mxu0 0
    %252 = vmatpush1.bf16.msra.mxu0 0
    %253 = vmatprep.subr.bf16.mxu0 0
    %254 = vmatpush1.bf16.msra.mxu0 0
    %255 = vmatprep.subr.bf16.mxu0 0
    %256 = vmatpush1.bf16.msra.mxu0 0
    %257 = vmatprep.subr.bf16.mxu0 0
    %258 = vmatpush1.bf16.msra.mxu0 0
    %259 = vmatprep.mubr.bf16.mxu0 0
    %260 = vmatmul.mubr.bf16.gmra.mrb[0].mxu0 %v180
    %v261 = vpop.f32.mrb[0].mxu0
    %v262 = vadd.f32 %v84, %v261
    %v263 = vpop.f32.mrb[0].mxu0
    %v264 = vpop.f32.mrb[0].mxu0
    %v265 = vadd.f32 %v84, %v264
    %v266 = vpop.f32.mrb[0].mxu0
    %267 = vmatprep.mubr.bf16.mxu0 0
    %268 = vmatmul.mubr.bf16.gmra.mrb[0].mxu0 %v183
    %v269 = vpop.f32.mrb[0].mxu0
    %v270 = vadd.f32 %v84, %v269
    %v271 = vpop.f32.mrb[0].mxu0
    %v272 = vpop.f32.mrb[0].mxu0
    %v273 = vadd.f32 %v84, %v272
    %v274 = vpop.f32.mrb[0].mxu0
    %275 = vmatprep.mubr.bf16.mxu0 0
    %276 = vmatmul.mubr.bf16.gmra.mrb[0].mxu0 %v186
    %v277 = vpop.f32.mrb[0].mxu0
    %v278 = vadd.f32 %v84, %v277
    %v279 = vpop.f32.mrb[0].mxu0
    %v280 = vpop.f32.mrb[0].mxu0
    %v281 = vadd.f32 %v84, %v280
    %v282 = vpop.f32.mrb[0].mxu0
    %283 = vmatprep.mubr.bf16.mxu0 0
    %284 = vmatmul.mubr.bf16.gmra.mrb[0].mxu0 %v189
    %v285 = vpop.f32.mrb[0].mxu0
    %v286 = vadd.f32 %v84, %v285
    %v287 = vpop.f32.mrb[0].mxu0
    %v288 = vpop.f32.mrb[0].mxu0
    %v289 = vadd.f32 %v84, %v288
    %v290 = vpop.f32.mrb[0].mxu0
    %291 = vmatprep.mubr.bf16.mxu0 0
    %292 = vmatmul.mubr.bf16.gmra.mrb[0].mxu0 %v192
    %v293 = vpop.f32.mrb[0].mxu0
    %v294 = vadd.f32 %v84, %v293
    %v295 = vpop.f32.mrb[0].mxu0
    %v296 = vpop.f32.mrb[0].mxu0
    %v297 = vadd.f32 %v84, %v296
    %v298 = vpop.f32.mrb[0].mxu0
    %299 = vmatprep.mubr.bf16.mxu0 0
    %300 = vmatmul.mubr.bf16.gmra.mrb[0].mxu0 %v195
    %v301 = vpop.f32.mrb[0].mxu0
    %v302 = vadd.f32 %v84, %v301
    %v303 = vpop.f32.mrb[0].mxu0
    %v304 = vpop.f32.mrb[0].mxu0
    %v305 = vadd.f32 %v84, %v304
    %v306 = vpop.f32.mrb[0].mxu0
    %307 = vmatprep.mubr.bf16.mxu0 0
    %308 = vmatmul.mubr.bf16.gmra.mrb[0].mxu0 %v198
    %v309 = vpop.f32.mrb[0].mxu0
    %v310 = vadd.f32 %v84, %v309
    %v311 = vpop.f32.mrb[0].mxu0
    %v312 = vpop.f32.mrb[0].mxu0
    %v313 = vadd.f32 %v84, %v312
    %v314 = vpop.f32.mrb[0].mxu0
    %315 = vmatprep.mubr.bf16.mxu0 0
    %316 = vmatmul.mubr.bf16.gmra.mrb[0].mxu0 %v201
    %v317 = vpop.f32.mrb[0].mxu0
    %v318 = vadd.f32 %v84, %v317
    %v319 = vpop.f32.mrb[0].mxu0
    %v320 = vpop.f32.mrb[0].mxu0
    %v321 = vadd.f32 %v84, %v320
    %v322 = vpop.f32.mrb[0].mxu0
    %323 = vmatprep.mubr.bf16.mxu0 0
    %324 = vmatmul.mubr.bf16.gmra.mrb[0].mxu0 %v204
    %v325 = vpop.f32.mrb[0].mxu0
    %v326 = vadd.f32 %v84, %v325
    %v327 = vpop.f32.mrb[0].mxu0
    %v328 = vpop.f32.mrb[0].mxu0
    %v329 = vadd.f32 %v84, %v328
    %v330 = vpop.f32.mrb[0].mxu0
    %331 = vmatprep.mubr.bf16.mxu0 0
    %332 = vmatmul.mubr.bf16.gmra.mrb[0].mxu0 %v207
    %v333 = vpop.f32.mrb[0].mxu0
    %v334 = vadd.f32 %v84, %v333
    %v335 = vpop.f32.mrb[0].mxu0
    %v336 = vpop.f32.mrb[0].mxu0
    %v337 = vadd.f32 %v84, %v336
    %v338 = vpop.f32.mrb[0].mxu0
    %339 = vmatprep.mubr.bf16.mxu0 0
    %340 = vmatmul.mubr.bf16.gmra.mrb[0].mxu0 %v210
    %v341 = vpop.f32.mrb[0].mxu0
    %v342 = vadd.f32 %v84, %v341
    %v343 = vpop.f32.mrb[0].mxu0
    %v344 = vpop.f32.mrb[0].mxu0
    %v345 = vadd.f32 %v84, %v344
    %v346 = vpop.f32.mrb[0].mxu0
    %347 = vmatprep.mubr.bf16.mxu0 0
    %348 = vmatmul.mubr.bf16.gmra.mrb[0].mxu0 %v213
    %v349 = vpop.f32.mrb[0].mxu0
    %v350 = vadd.f32 %v84, %v349
    %v351 = vpop.f32.mrb[0].mxu0
    %v352 = vpop.f32.mrb[0].mxu0
    %v353 = vadd.f32 %v84, %v352
    %v354 = vpop.f32.mrb[0].mxu0
    %355 = vmatprep.mubr.bf16.mxu0 0
    %356 = vmatmul.mubr.bf16.gmra.mrb[0].mxu0 %v216
    %v357 = vpop.f32.mrb[0].mxu0
    %v358 = vadd.f32 %v84, %v357
    %v359 = vpop.f32.mrb[0].mxu0
    %v360 = vpop.f32.mrb[0].mxu0
    %v361 = vadd.f32 %v84, %v360
    %v362 = vpop.f32.mrb[0].mxu0
    %363 = vmatprep.mubr.bf16.mxu0 0
    %364 = vmatmul.mubr.bf16.gmra.mrb[0].mxu0 %v219
    %v365 = vpop.f32.mrb[0].mxu0
    %v366 = vadd.f32 %v84, %v365
    %v367 = vpop.f32.mrb[0].mxu0
    %v368 = vpop.f32.mrb[0].mxu0
    %v369 = vadd.f32 %v84, %v368
    %v370 = vpop.f32.mrb[0].mxu0
    %371 = vmatprep.mubr.bf16.mxu0 0
    %372 = vmatmul.mubr.bf16.gmra.mrb[0].mxu0 %v222
    %v373 = vpop.f32.mrb[0].mxu0
    %v374 = vadd.f32 %v84, %v373
    %v375 = vpop.f32.mrb[0].mxu0
    %v376 = vpop.f32.mrb[0].mxu0
    %v377 = vadd.f32 %v84, %v376
    %v378 = vpop.f32.mrb[0].mxu0
    %379 = vmatprep.mubr.bf16.mxu0 0
    %380 = vmatmul.mubr.bf16.gmra.mrb[0].mxu0 %v225
    %v381 = vpop.f32.mrb[0].mxu0
    %v382 = vadd.f32 %v84, %v381
    %v383 = vpop.f32.mrb[0].mxu0
    %v384 = vpop.f32.mrb[0].mxu0
    %v385 = vadd.f32 %v84, %v384
    %v386 = vpop.f32.mrb[0].mxu0
    %387 = vdwg.mxu0
    %v388 = vtanh.pop %v262
    %v389 = vtanh.pop %v265
    %v390 = vtanh.pop %v270
    %v391 = vtanh.pop %v273
    %v392 = vtanh.pop %v278
    %v393 = vtanh.pop %v281
    %v394 = vtanh.pop %v286
    %v395 = vtanh.pop %v289
    %v396 = vtanh.pop %v294
    %v397 = vtanh.pop %v297
    %v398 = vtanh.pop %v302
    %v399 = vtanh.pop %v305
    %v400 = vtanh.pop %v310
    %v401 = vtanh.pop %v313
    %v402 = vtanh.pop %v318
    %v403 = vtanh.pop %v321
    %v404 = vtanh.pop %v326
    %v405 = vtanh.pop %v329
    %v406 = vtanh.pop %v334
    %v407 = vtanh.pop %v337
    %v408 = vtanh.pop %v342
    %v409 = vtanh.pop %v345
    %v410 = vtanh.pop %v350
    %v411 = vtanh.pop %v353
    %v412 = vtanh.pop %v358
    %v413 = vtanh.pop %v361
    %v414 = vtanh.pop %v366
    %v415 = vtanh.pop %v369
    %v416 = vtanh.pop %v374
    %v417 = vtanh.pop %v377
    %v418 = vtanh.pop %v382
    %v419 = vtanh.pop %v385
    %v420 = vadd.f32 %v388, %v404
    %v421 = vadd.f32 %v389, %v405
    %v422 = vadd.f32 %v390, %v406
    %v423 = vadd.f32 %v391, %v407
    %v424 = vadd.f32 %v392, %v408
    %v425 = vadd.f32 %v393, %v409
    %v426 = vadd.f32 %v394, %v410
    %v427 = vadd.f32 %v395, %v411
    %v428 = vadd.f32 %v396, %v412
    %v429 = vadd.f32 %v397, %v413
    %v430 = vadd.f32 %v398, %v414
    %v431 = vadd.f32 %v399, %v415
    %v432 = vadd.f32 %v400, %v416
    %v433 = vadd.f32 %v401, %v417
    %v434 = vadd.f32 %v402, %v418
    %v435 = vadd.f32 %v403, %v419
    %v436 = vadd.f32 %v420, %v428
    %v437 = vadd.f32 %v421, %v429
    %v438 = vadd.f32 %v422, %v430
    %v439 = vadd.f32 %v423, %v431
    %v440 = vadd.f32 %v424, %v432
    %v441 = vadd.f32 %v425, %v433
    %v442 = vadd.f32 %v426, %v434
    %v443 = vadd.f32 %v427, %v435
    %v444 = vadd.f32 %v436, %v440
    %v445 = vadd.f32 %v437, %v441
    %v446 = vadd.f32 %v438, %v442
    %v447 = vadd.f32 %v439, %v443
    %v448 = vadd.f32 %v444, %v446
    %v449 = vadd.f32 %v445, %v447
    %v450 = vadd.f32 %v448, %v449
    %v451 = vld [vmem:[#allocation2] sm:$0xff]
    %v452 = vadd.f32 %v451, %v450
    %453 = vst [vmem:[#allocation2] sm:$0xff] %v452
    // Predicated region
    $region18: #{tpu_custom_call.1} parent=1 // pred_check
      _
    $region19: #{tpu_custom_call.1} parent=1 // pred_check_branch
      %455 = sbr.rel (0) target = $region21
    $region20: #{tpu_custom_call.1} parent=1 // pred_region
      %s457 = ssub.s32 128, 128
      %458 = vsyncadd [#allocation3], %s457
      %s460 = sshll.u32 [#allocation2], 4
      %s461 = int_to_ptr.vmem [resolvable:$true] %s460
      %463 = dma.vmem_to_hbm [thread:$0]  %s461, 128, %s3, [#allocation3]
    $region21: #{tpu_custom_call.1} parent=1 // pred_fallthru
      _
    // Predicated region
    $region22: #{tpu_custom_call.1} parent=1 // pred_check
      _
    $region23: #{tpu_custom_call.1} parent=1 // pred_check_branch
      %465 = sbr.rel (0) target = $region25
    $region24: #{tpu_custom_call.1} parent=1 // pred_region
      %466 = dma.done [#allocation3], 128
    $region25: #{tpu_custom_call.1} parent=1 // pred_fallthru
      _
    %467 = vsyncpa [#allocation3], 1

</llo_original>
